<compile_context>
chip_gen: v7x
topology: tpu7x:2x2x1
jax: 0.10.0
libtpu: 0.0.40
codegen_flags: <defaults>
</compile_context>

<pallas_src>
import functools

import jax
import jax.numpy as jnp
from jax import lax
from jax.experimental import pallas as pl
from jax.experimental.pallas import tpu as pltpu


def _vmem_capacity_bytes():
    """Per-TensorCore VMEM capacity; conservative fallback if query fails."""
    try:
        info = pltpu.get_tpu_info()
        cap = getattr(info, "vmem_capacity_bytes", None)
        if cap:
            return int(cap)
    except Exception:
        pass
    return 64 * 1024 * 1024  # v7x per-core VMEM — safe lower bound everywhere


def _dice_sums_kernel(x_ref, t_ref, inter_ref, din_ref, dtg_ref,
                      *, n_valid, tile_n, inner_v, first_full, needs_mask):
    """Accumulates per-channel Dice statistics over voxel tiles.

    x_ref:     (1, C, tn) logits tile
    t_ref:     (1, 1, tn) integer label tile (any int dtype, cast in-kernel)
    inter_ref, din_ref, dtg_ref: (1, C, 1) f32 accumulators, resident across
        the innermost voxel grid axis for the current (batch, chunk).
    """
    chunk = pl.program_id(1)
    v = pl.program_id(2)
    g = chunk * inner_v + v            # global voxel-tile index

    @pl.when(v == 0)
    def _():
        inter_ref[...] = jnp.zeros_like(inter_ref)
        din_ref[...] = jnp.zeros_like(din_ref)
        dtg_ref[...] = jnp.zeros_like(dtg_ref)

    def accumulate(masked):
        x = x_ref[0].astype(jnp.float32)            # (C, tn)
        t = t_ref[0].astype(jnp.int32)              # (1, tn)

        if masked:
            lane_ids = lax.broadcasted_iota(jnp.int32, (1, tile_n), 1)
            valid = (g * tile_n + lane_ids) < n_valid            # (1, tn) bool
            # NaN-safety: never feed padded-lane garbage into exp/softmax.
            x = jnp.where(valid, x, 0.0)

        # softmax over the class (sublane) axis == nn.Softmax(dim=1) in NCHWD
        m = jnp.max(x, axis=0, keepdims=True)
        e = jnp.exp(x - m)
        inv = pl.reciprocal(jnp.sum(e, axis=0, keepdims=True), approx=False)
        p = e * inv                                  # (C, tn)

        # one-hot expansion via a tiny (C, 1) iota broadcast against labels
        cls_ids = lax.broadcasted_iota(jnp.int32, (x.shape[0], 1), 0)
        onehot = (cls_ids == t).astype(jnp.float32)  # (C, tn)

        if masked:
            # select (not multiply) so stale lanes can never poison the sums
            p = jnp.where(valid, p, 0.0)
            onehot = jnp.where(valid, onehot, 0.0)

        # per-channel partial sums over this voxel tile (lane reductions)
        inter_ref[0] += jnp.sum(p * onehot, axis=1, keepdims=True)
        din_ref[0] += jnp.sum(p * p, axis=1, keepdims=True)
        dtg_ref[0] += jnp.sum(onehot, axis=1, keepdims=True)    # onehot^2 == onehot

    if needs_mask:
        # Hot path (all full tiles): no iota / compare / select work.
        @pl.when(g < first_full)
        def _():
            accumulate(masked=False)

        # Cold path: only the (single) partial tile pays the masking cost.
        @pl.when(g >= first_full)
        def _():
            accumulate(masked=True)
    else:
        accumulate(masked=False)


def dice_loss(logits, target, weight, epsilon=1e-6, tn=32768,
              cast_logits_to_bf16=False):
    """DiceLoss.forward  (softmax normalization, mode='extension').

    logits: (B, C, H, W, D) float (f32 or bf16)
    target: (B, H, W, D) integer labels in [0, C)  (int8 recommended)
    weight: (C,) per-class weights
    """
    B, C, H, W, D = logits.shape
    HWD = H * W * D

    if cast_logits_to_bf16:
        # Halves logits HBM traffic (useful on v5e/v6e); kernel math stays f32.
        logits = logits.astype(jnp.bfloat16)

    # Natural layout: merge only trailing dims (free reshape), NO transpose.
    x = logits.reshape(B, C, HWD)
    t = target.reshape(B, 1, HWD)     # keep caller's (narrow) integer dtype

    # ---- generation-aware voxel tile size -------------------------------
    vmem_cap = _vmem_capacity_bytes()
    x_bytes = jnp.dtype(x.dtype).itemsize
    t_bytes = jnp.dtype(t.dtype).itemsize
    # per-lane VMEM cost: double-buffered logits/label blocks + ~8 f32 (C, tn)
    # temporaries alive in the body (x_f32, e, p, onehot, products, ...).
    bytes_per_lane = C * (2 * x_bytes + 8 * 4) + 2 * t_bytes
    tn_cap = max(128, (int(0.6 * vmem_cap) // bytes_per_lane) // 128 * 128)
    tn_req = min(tn, tn_cap)

    # Lane tile: either the full voxel extent (always legal as a block dim)
    # or a large multiple of 128; remainder covered by the cold-path mask.
    if HWD <= tn_req:
        tn_eff = HWD
    else:
        tn_eff = max(128, (tn_req // 128) * 128)

    grid_v = pl.cdiv(HWD, tn_eff)
    first_full = HWD // tn_eff            # number of mask-free tiles
    needs_mask = (HWD % tn_eff) != 0

    # Parallel voxel-chunk axis: keeps both v7x TensorCores busy when B alone
    # gives no (or odd) parallelism.  Only used when the tile count splits
    # evenly, so no out-of-bounds tiles are ever generated.
    n_chunks = 2 if (B % 2 == 1 and grid_v >= 2 and grid_v % 2 == 0) else 1
    inner_v = grid_v // n_chunks

    est_vmem = tn_eff * bytes_per_lane + 3 * C * 4
    vmem_limit = int(min(0.8 * vmem_cap, max(32 * 2**20, 2 * est_vmem)))

    kernel = functools.partial(
        _dice_sums_kernel, n_valid=HWD, tile_n=tn_eff, inner_v=inner_v,
        first_full=first_full, needs_mask=needs_mask)

    n_acc = B * n_chunks
    out_shape = (
        jax.ShapeDtypeStruct((n_acc, C, 1), jnp.float32),  # intersect   per (b, chunk, c)
        jax.ShapeDtypeStruct((n_acc, C, 1), jnp.float32),  # sum(p^2)    per (b, chunk, c)
        jax.ShapeDtypeStruct((n_acc, C, 1), jnp.float32),  # sum(onehot) per (b, chunk, c)
    )
    acc_spec = pl.BlockSpec((1, C, 1), lambda b, c, v: (b * n_chunks + c, 0, 0))

    # TODO(synk): if DMA is still exposed on v5e after bf16 + large tn, bump the
    # logits BlockSpec to pipeline_mode=pl.Buffered(3).
    inter, den_in, den_tg = pl.pallas_call(
        kernel,
        out_shape=out_shape,
        grid_spec=pltpu.PrefetchScalarGridSpec(
            num_scalar_prefetch=0,
            grid=(B, n_chunks, inner_v),
            in_specs=[
                pl.BlockSpec((1, C, tn_eff),
                             lambda b, c, v: (b, 0, c * inner_v + v)),
                pl.BlockSpec((1, 1, tn_eff),
                             lambda b, c, v: (b, 0, c * inner_v + v)),
            ],
            out_specs=[acc_spec, acc_spec, acc_spec],
        ),
        compiler_params=pltpu.CompilerParams(
            # batch & chunk axes sharded across TensorCores (v7x); the inner
            # voxel axis is the sequential reduction axis.
            dimension_semantics=("parallel", "parallel", "arbitrary"),
            vmem_limit_bytes=vmem_limit,
        ),
    )(x, t)

    # tiny epilogue in plain JAX: reduce per-(batch, chunk) partials, form loss
    intersect = jnp.sum(inter[:, :, 0], axis=0)                       # (C,)
    denominator = jnp.sum(den_in[:, :, 0] + den_tg[:, :, 0], axis=0)  # (C,) squared sums

    # compute_per_channel_dice: 2 * intersect / clamp(denominator, min=eps)
    per_channel_dice = 2.0 * intersect / jnp.maximum(denominator, epsilon)

    # zero out weights of classes whose dice is exactly 0 (matches PyTorch;
    # NOTE: like the reference module, this yields NaN if every dice is 0)
    real_weight = jnp.where(per_channel_dice == 0.0, 0.0, weight.astype(jnp.float32))
    weighted_dsc = jnp.sum(per_channel_dice * real_weight) / jnp.sum(real_weight)
    loss = 1.0 - weighted_dsc
    return loss


def _dice_loss_ref(logits, target, weight, epsilon=1e-6):
    """Pure-JAX reference of the PyTorch module (softmax, mode='extension')."""
    B, C = logits.shape[:2]
    p = jax.nn.softmax(logits.astype(jnp.float32), axis=1).reshape(B, C, -1)
    oh = jax.nn.one_hot(target.reshape(B, -1).astype(jnp.int32), C,
                        dtype=jnp.float32).transpose(0, 2, 1)          # (B, C, HWD)
    intersect = jnp.sum(p * oh, axis=(0, 2))
    denom = jnp.sum(p * p, axis=(0, 2)) + jnp.sum(oh * oh, axis=(0, 2))
    dice = 2.0 * intersect / jnp.maximum(denom, epsilon)
    rw = jnp.where(dice == 0.0, 0.0, weight.astype(jnp.float32))
    return 1.0 - jnp.sum(dice * rw) / jnp.sum(rw)


if __name__ == "__main__":
    key = jax.random.PRNGKey(0)

    # --- case 1: single full-extent tile, even batch ----------------------
    B, C, H, W, D = 2, 4, 8, 8, 8
    k1, k2 = jax.random.split(key)
    logits = jax.random.normal(k1, (B, C, H, W, D), dtype=jnp.float32)
    target = jax.random.randint(k2, (B, H, W, D), 0, C, dtype=jnp.int32).astype(jnp.int8)
    weight = (jnp.arange(C, dtype=jnp.float32) + 1.0) / float(C)

    loss = dice_loss(logits, target, weight)
    jax.block_until_ready(loss)
    assert loss.shape == () and bool(jnp.isfinite(loss))
    ref = _dice_loss_ref(logits, target, weight)
    assert bool(jnp.abs(loss - ref) < 1e-5), (loss, ref)

    # --- case 2: odd batch, multi-tile with partial last tile -------------
    # exercises the chunk-parallel axis, the mask-free hot path and the
    # NaN-safe masked cold path.
    B2, C2, H2, W2, D2 = 1, 4, 8, 8, 15          # HWD = 960 = 7*128 + 64
    k3, k4 = jax.random.split(k1)
    logits2 = jax.random.normal(k3, (B2, C2, H2, W2, D2), dtype=jnp.float32)
    target2 = jax.random.randint(k4, (B2, H2, W2, D2), 0, C2,
                                 dtype=jnp.int32).astype(jnp.int8)
    weight2 = (jnp.arange(C2, dtype=jnp.float32) + 1.0) / float(C2)

    loss2 = dice_loss(logits2, target2, weight2, tn=128)
    jax.block_until_ready(loss2)
    assert loss2.shape == () and bool(jnp.isfinite(loss2))
    ref2 = _dice_loss_ref(logits2, target2, weight2)
    assert bool(jnp.abs(loss2 - ref2) < 1e-5), (loss2, ref2)

    print("KERNEL_OK")
</pallas_src>

<mosaic_0001>
module attributes {stable_mosaic.version = 11 : i64} {
  func.func @_dice_sums_kernel(%arg0: i32, %arg1: i32, %arg2: i32, %arg3: memref<1x4x512xf32, #tpu.memory_space<vmem>>, %arg4: memref<1x1x512xi8, #tpu.memory_space<vmem>>, %arg5: memref<1x4x1xf32, #tpu.memory_space<vmem>>, %arg6: memref<1x4x1xf32, #tpu.memory_space<vmem>>, %arg7: memref<1x4x1xf32, #tpu.memory_space<vmem>>) attributes {dimension_semantics = [#tpu.dimension_semantics<parallel>, #tpu.dimension_semantics<parallel>, #tpu.dimension_semantics<arbitrary>], iteration_bounds = array<i64: 2, 1, 1>, scalar_prefetch = 0 : i64, scratch_operands = 0 : i64, tpu.core_type = #tpu.core_type<tc>, window_params = [{transform_indices = @transform_0, window_bounds = array<i64: 1, 4, 512>}, {transform_indices = @transform_1, window_bounds = array<i64: 1, 1, 512>}, {transform_indices = @transform_2, window_bounds = array<i64: 1, 4, 1>}, {transform_indices = @transform_3, window_bounds = array<i64: 1, 4, 1>}, {transform_indices = @transform_4, window_bounds = array<i64: 1, 4, 1>}]} {
    %c0_i32 = arith.constant 0 : i32
    %0 = arith.cmpi eq, %arg2, %c0_i32 : i32
    %1 = arith.extui %0 : i1 to i32
    %c0_i32_0 = arith.constant 0 : i32
    %2 = arith.cmpi ne, %1, %c0_i32_0 : i32
    scf.if %2 {
      %cst_28 = arith.constant 0.000000e+00 : f32
      %50 = vector.broadcast %cst_28 : f32 to vector<1x4x1xf32>
      %c0_29 = arith.constant 0 : index
      %c0_30 = arith.constant 0 : index
      %c0_31 = arith.constant 0 : index
      %51 = vector.load %arg5[%c0_29, %c0_30, %c0_31] : memref<1x4x1xf32, #tpu.memory_space<vmem>>, vector<1x4x1xf32>
      tpu.vector_store %arg5[%c0_29, %c0_30, %c0_31], %50 {strides = array<i32>} : memref<1x4x1xf32, #tpu.memory_space<vmem>>, vector<1x4x1xf32>,
      %cst_32 = arith.constant 0.000000e+00 : f32
      %52 = vector.broadcast %cst_32 : f32 to vector<1x4x1xf32>
      %c0_33 = arith.constant 0 : index
      %c0_34 = arith.constant 0 : index
      %c0_35 = arith.constant 0 : index
      %53 = vector.load %arg6[%c0_33, %c0_34, %c0_35] : memref<1x4x1xf32, #tpu.memory_space<vmem>>, vector<1x4x1xf32>
      tpu.vector_store %arg6[%c0_33, %c0_34, %c0_35], %52 {strides = array<i32>} : memref<1x4x1xf32, #tpu.memory_space<vmem>>, vector<1x4x1xf32>,
      %cst_36 = arith.constant 0.000000e+00 : f32
      %54 = vector.broadcast %cst_36 : f32 to vector<1x4x1xf32>
      %c0_37 = arith.constant 0 : index
      %c0_38 = arith.constant 0 : index
      %c0_39 = arith.constant 0 : index
      %55 = vector.load %arg7[%c0_37, %c0_38, %c0_39] : memref<1x4x1xf32, #tpu.memory_space<vmem>>, vector<1x4x1xf32>
      tpu.vector_store %arg7[%c0_37, %c0_38, %c0_39], %54 {strides = array<i32>} : memref<1x4x1xf32, #tpu.memory_space<vmem>>, vector<1x4x1xf32>,
    } else {
    }
    %c0 = arith.constant 0 : index
    %c0_1 = arith.constant 0 : index
    %c0_2 = arith.constant 0 : index
    %3 = vector.load %arg3[%c0, %c0_1, %c0_2] : memref<1x4x512xf32, #tpu.memory_space<vmem>>, vector<1x4x512xf32>
    %4 = vector.shape_cast %3 : vector<1x4x512xf32> to vector<4x512xf32>
    %c0_3 = arith.constant 0 : index
    %c0_4 = arith.constant 0 : index
    %c0_5 = arith.constant 0 : index
    %5 = vector.load %arg4[%c0_3, %c0_4, %c0_5] : memref<1x1x512xi8, #tpu.memory_space<vmem>>, vector<1x1x512xi8>
    %6 = vector.shape_cast %5 : vector<1x1x512xi8> to vector<1x512xi8>
    %7 = arith.extsi %6 : vector<1x512xi8> to vector<1x512xi32>
    %cst = arith.constant dense<0xFF800000> : vector<512xf32>
    %8 = vector.multi_reduction <maximumf>, %4, %cst [0] : vector<4x512xf32> to vector<512xf32>
    %9 = vector.shape_cast %8 : vector<512xf32> to vector<1x512xf32>
    %10 = vector.broadcast %9 : vector<1x512xf32> to vector<4x512xf32>
    %11 = arith.subf %4, %10 : vector<4x512xf32>
    %12 = math.exp %11 : vector<4x512xf32>
    %cst_6 = arith.constant dense<0.000000e+00> : vector<512xf32>
    %13 = vector.multi_reduction <add>, %12, %cst_6 [0] : vector<4x512xf32> to vector<512xf32>
    %14 = vector.shape_cast %13 : vector<512xf32> to vector<1x512xf32>
    %15 = tpu.reciprocal %14 : vector<1x512xf32> -> vector<1x512xf32>
    %16 = vector.broadcast %15 : vector<1x512xf32> to vector<4x512xf32>
    %17 = arith.mulf %12, %16 : vector<4x512xf32>
    %18 = tpu.iota {dimensions = array<i32: 0>} : vector<4x1xi32>
    %19 = vector.broadcast %18 : vector<4x1xi32> to vector<4x512xi32>
    %20 = vector.broadcast %7 : vector<1x512xi32> to vector<4x512xi32>
    %21 = arith.cmpi eq, %19, %20 : vector<4x512xi32>
    %22 = arith.extui %21 : vector<4x512xi1> to vector<4x512xi32>
    %23 = arith.sitofp %22 : vector<4x512xi32> to vector<4x512xf32>
    %c0_7 = arith.constant 0 : index
    %c0_8 = arith.constant 0 : index
    %c0_9 = arith.constant 0 : index
    %24 = vector.load %arg5[%c0_7, %c0_8, %c0_9] : memref<1x4x1xf32, #tpu.memory_space<vmem>>, vector<1x4x1xf32>
    %25 = vector.shape_cast %24 : vector<1x4x1xf32> to vector<4x1xf32>
    %26 = arith.mulf %17, %23 : vector<4x512xf32>
    %cst_10 = arith.constant dense<0.000000e+00> : vector<4xf32>
    %27 = vector.multi_reduction <add>, %26, %cst_10 [1] : vector<4x512xf32> to vector<4xf32>
    %28 = vector.shape_cast %27 : vector<4xf32> to vector<4x1xf32>
    %29 = arith.addf %25, %28 : vector<4x1xf32>
    %c0_11 = arith.constant 0 : index
    %c0_12 = arith.constant 0 : index
    %c0_13 = arith.constant 0 : index
    %30 = vector.load %arg5[%c0_11, %c0_12, %c0_13] : memref<1x4x1xf32, #tpu.memory_space<vmem>>, vector<1x4x1xf32>
    %31 = vector.shape_cast %30 : vector<1x4x1xf32> to vector<4x1xf32>
    %32 = vector.shape_cast %29 : vector<4x1xf32> to vector<1x4x1xf32>
    tpu.vector_store %arg5[%c0_11, %c0_12, %c0_13], %32 {strides = array<i32>} : memref<1x4x1xf32, #tpu.memory_space<vmem>>, vector<1x4x1xf32>,
    %c0_14 = arith.constant 0 : index
    %c0_15 = arith.constant 0 : index
    %c0_16 = arith.constant 0 : index
    %33 = vector.load %arg6[%c0_14, %c0_15, %c0_16] : memref<1x4x1xf32, #tpu.memory_space<vmem>>, vector<1x4x1xf32>
    %34 = vector.shape_cast %33 : vector<1x4x1xf32> to vector<4x1xf32>
    %35 = arith.mulf %17, %17 : vector<4x512xf32>
    %cst_17 = arith.constant dense<0.000000e+00> : vector<4xf32>
    %36 = vector.multi_reduction <add>, %35, %cst_17 [1] : vector<4x512xf32> to vector<4xf32>
    %37 = vector.shape_cast %36 : vector<4xf32> to vector<4x1xf32>
    %38 = arith.addf %34, %37 : vector<4x1xf32>
    %c0_18 = arith.constant 0 : index
    %c0_19 = arith.constant 0 : index
    %c0_20 = arith.constant 0 : index
    %39 = vector.load %arg6[%c0_18, %c0_19, %c0_20] : memref<1x4x1xf32, #tpu.memory_space<vmem>>, vector<1x4x1xf32>
    %40 = vector.shape_cast %39 : vector<1x4x1xf32> to vector<4x1xf32>
    %41 = vector.shape_cast %38 : vector<4x1xf32> to vector<1x4x1xf32>
    tpu.vector_store %arg6[%c0_18, %c0_19, %c0_20], %41 {strides = array<i32>} : memref<1x4x1xf32, #tpu.memory_space<vmem>>, vector<1x4x1xf32>,
    %c0_21 = arith.constant 0 : index
    %c0_22 = arith.constant 0 : index
    %c0_23 = arith.constant 0 : index
    %42 = vector.load %arg7[%c0_21, %c0_22, %c0_23] : memref<1x4x1xf32, #tpu.memory_space<vmem>>, vector<1x4x1xf32>
    %43 = vector.shape_cast %42 : vector<1x4x1xf32> to vector<4x1xf32>
    %cst_24 = arith.constant dense<0.000000e+00> : vector<4xf32>
    %44 = vector.multi_reduction <add>, %23, %cst_24 [1] : vector<4x512xf32> to vector<4xf32>
    %45 = vector.shape_cast %44 : vector<4xf32> to vector<4x1xf32>
    %46 = arith.addf %43, %45 : vector<4x1xf32>
    %c0_25 = arith.constant 0 : index
    %c0_26 = arith.constant 0 : index
    %c0_27 = arith.constant 0 : index
    %47 = vector.load %arg7[%c0_25, %c0_26, %c0_27] : memref<1x4x1xf32, #tpu.memory_space<vmem>>, vector<1x4x1xf32>
    %48 = vector.shape_cast %47 : vector<1x4x1xf32> to vector<4x1xf32>
    %49 = vector.shape_cast %46 : vector<4x1xf32> to vector<1x4x1xf32>
    tpu.vector_store %arg7[%c0_25, %c0_26, %c0_27], %49 {strides = array<i32>} : memref<1x4x1xf32, #tpu.memory_space<vmem>>, vector<1x4x1xf32>,
    return
  }
  func.func @transform_0(%arg0: i32, %arg1: i32, %arg2: i32) -> (i32, i32, i32) {
    %c1_i32 = arith.constant 1 : i32
    %0 = arith.muli %arg1, %c1_i32 : i32
    %1 = arith.addi %0, %arg2 : i32
    %c0_i32 = arith.constant 0 : i32
    %c0_i32_0 = arith.constant 0 : i32
    return %arg0, %c0_i32, %1 : i32, i32, i32
  }
  func.func @transform_1(%arg0: i32, %arg1: i32, %arg2: i32) -> (i32, i32, i32) {
    %c1_i32 = arith.constant 1 : i32
    %0 = arith.muli %arg1, %c1_i32 : i32
    %1 = arith.addi %0, %arg2 : i32
    %c0_i32 = arith.constant 0 : i32
    %c0_i32_0 = arith.constant 0 : i32
    return %arg0, %c0_i32, %1 : i32, i32, i32
  }
  func.func @transform_2(%arg0: i32, %arg1: i32, %arg2: i32) -> (i32, i32, i32) {
    %c1_i32 = arith.constant 1 : i32
    %0 = arith.muli %arg0, %c1_i32 : i32
    %1 = arith.addi %0, %arg1 : i32
    %c0_i32 = arith.constant 0 : i32
    %c0_i32_0 = arith.constant 0 : i32
    %c0_i32_1 = arith.constant 0 : i32
    return %1, %c0_i32, %c0_i32_0 : i32, i32, i32
  }
  func.func @transform_3(%arg0: i32, %arg1: i32, %arg2: i32) -> (i32, i32, i32) {
    %c1_i32 = arith.constant 1 : i32
    %0 = arith.muli %arg0, %c1_i32 : i32
    %1 = arith.addi %0, %arg1 : i32
    %c0_i32 = arith.constant 0 : i32
    %c0_i32_0 = arith.constant 0 : i32
    %c0_i32_1 = arith.constant 0 : i32
    return %1, %c0_i32, %c0_i32_0 : i32, i32, i32
  }
  func.func @transform_4(%arg0: i32, %arg1: i32, %arg2: i32) -> (i32, i32, i32) {
    %c1_i32 = arith.constant 1 : i32
    %0 = arith.muli %arg0, %c1_i32 : i32
    %1 = arith.addi %0, %arg1 : i32
    %c0_i32 = arith.constant 0 : i32
    %c0_i32_0 = arith.constant 0 : i32
    %c0_i32_1 = arith.constant 0 : i32
    return %1, %c0_i32, %c0_i32_0 : i32, i32, i32
  }
}

</mosaic_0001>

<llo_original>
// kernel: tpu_custom_call.1
$region0: #{tpu_custom_call.1}
  #allocation0 [shape = 'u32[]', space=smem, size = 0x4, offset = 0x4, fixed_abs, tag = 'smem constant byte address 0x4 - core index']
  #allocation1 [shape = 'u32[144,128]{1,0:T(1,128)}', space=vmem, size = 0x12000, scoped, tag = 'internal scratch']
  %s0 = inlined_call_operand.hbm [shape: f32[2,4,512], index: 0, kind: input, shape index: {}]
  %s1 = inlined_call_operand.vmem [shape: s8[2,1,512], index: 1, kind: input, shape index: {}]
  %s2 = inlined_call_operand.vmem [shape: f32[2,4,1], index: 2, kind: output, shape index: {0}]
  %s3 = inlined_call_operand.vmem [shape: f32[2,4,1], index: 3, kind: output, shape index: {1}]
  %s4 = inlined_call_operand.vmem [shape: f32[2,4,1], index: 4, kind: output, shape index: {2}]
  %5 = xla_tuple %s2, %s3, %s4
  %s6 = sld [smem:[#allocation0]]
  $region65: #{tpu_custom_call.1} parent=0
    _
  %s8 = ssub.s32 1, %s6
  %s9 = scalar_select 0, %s8, %s6
  $region1: #{tpu_custom_call.1} parent=0
    #allocation2 [shape = 'u8[16384]{0}', space=vmem, size = 0x4000, scoped, tag = 'input window, operand 0']
    #allocation3 [shape = 's32[2]{0}', space=sflag, size = 0x8, scoped, tag = 'scoped memory for tpu_custom_call.1']
    %10 = vsyncpa [#allocation3], 0
    %s11 = scalar_lea.sflag [#allocation3], 1
    %12 = vsyncpa %s11, 0
    loop: start=0, step=1, limit=4
    $region2: #{tpu_custom_call.1} parent=1 // loop_pre_header
      _
    $region3: #{tpu_custom_call.1} parent=1 // loop_header
      %s14 = sphi 0, %s18
      %p15 = scmp.ge.s32.totalorder %s14, 4
      %s21 = sphi 0, %s40
      %s22 = sphi 0, %s36
      %s23 = sphi 0, %s32
      %s24 = sphi 0, %s21
      %s25 = sphi 0, %s22
      %s26 = sphi 0, %s23
      %s27 = sphi 0, %s24
      %s28 = sphi 0, %s25
      %s29 = sphi 0, %s26
      %s47 = sphi 0, %s49
      %s50 = sphi 0, %s47
      %s51 = sphi 0, %s50
      %s67 = sphi 0, %s51
      %s77 = sphi 0, %s79
      %s80 = sphi 0, %s77
      %s81 = sphi 0, %s80
      %s97 = sphi 0, %s81
      %s105 = sphi 0, %s107
      %s108 = sphi 0, %s105
      %s109 = sphi 0, %s108
      %s125 = sphi 0, %s109
      %s133 = sphi 0, %s135
      %s136 = sphi 0, %s133
      %s137 = sphi 0, %s136
      %s153 = sphi 0, %s137
      %s161 = sphi 0, %s163
      %s164 = sphi 0, %s161
      %s165 = sphi 0, %s164
      %s181 = sphi 0, %s165
    $region4: #{tpu_custom_call.1} parent=1 // loop_header_branch
      %17 = sbr.rel (%p15) target = $region8
    $region5: #{tpu_custom_call.1} parent=1 // loop_body
      %s19 = ssub.s32 %s14, 1
      %s20 = ssub.s32 %s14, 2
      %s30 = sadd.s32 1, %s23
      %p31 = scmp.ge.s32.totalorder %s30, 1
      %s32 = scalar_select %p31, 0, %s30
      %s33 = sadd.s32 1, %s22
      %s34 = scalar_select %p31, %s33, %s22
      %p35 = scmp.ge.s32.totalorder %s34, 1
      %s36 = scalar_select %p35, 0, %s34
      %s37 = sadd.s32 1, %s21
      %s38 = scalar_select %p35, %s37, %s21
      %p39 = scmp.ge.s32.totalorder %s38, 2
      %s40 = scalar_select %p39, 0, %s38
      %s41 = sadd.s32 %s22, %s23
      %s42 = sadd.s32 %s36, %s32
      %s43 = ssub.s32 %s21, %s40
      %s44 = ssub.s32 %s41, %s42
      %s45 = sor.u32 %s43, %s44
      %p46 = scmp.eq.s32.totalorder %s45, 0
      %s48 = sadd.s32 %s47, 1
      %s49 = scalar_select %p46, %s47, %s48
      %p52 = pneg %p46
      %p53 = scmp.eq.s32.totalorder %s14, 1
      %p54 = por %p52, %p53
      %p55 = scmp.ne.s32.totalorder %s47, %s50
      %p56 = scmp.eq.s32.totalorder %s14, 0
      %p57 = por %p55, %p56
      %p58 = scmp.ne.s32.totalorder %s47, %s50
      %p59 = scmp.eq.s32.totalorder %s19, 1
      %p60 = por %p58, %p59
      %p61 = scmp.ne.s32.totalorder %s50, %s51
      %p62 = scmp.eq.s32.totalorder %s19, 0
      %p63 = por %p61, %p62
      %p64 = scmp.ne.s32.totalorder %s50, %s51
      %p65 = scmp.eq.s32.totalorder %s20, 1
      %p66 = por %p64, %p65
      %p68 = scmp.ne.s32.totalorder %s51, %s67
      %p69 = scmp.eq.s32.totalorder %s20, 0
      %p70 = por %p68, %p69
      %s71 = sadd.s32 %s22, %s23
      %s72 = sadd.s32 %s36, %s32
      %s73 = ssub.s32 %s21, %s40
      %s74 = ssub.s32 %s71, %s72
      %s75 = sor.u32 %s73, %s74
      %p76 = scmp.eq.s32.totalorder %s75, 0
      %s78 = sadd.s32 %s77, 1
      %s79 = scalar_select %p76, %s77, %s78
      %p82 = pneg %p76
      %p83 = scmp.eq.s32.totalorder %s14, 1
      %p84 = por %p82, %p83
      %p85 = scmp.ne.s32.totalorder %s77, %s80
      %p86 = scmp.eq.s32.totalorder %s14, 0
      %p87 = por %p85, %p86
      %p88 = scmp.ne.s32.totalorder %s77, %s80
      %p89 = scmp.eq.s32.totalorder %s19, 1
      %p90 = por %p88, %p89
      %p91 = scmp.ne.s32.totalorder %s80, %s81
      %p92 = scmp.eq.s32.totalorder %s19, 0
      %p93 = por %p91, %p92
      %p94 = scmp.ne.s32.totalorder %s80, %s81
      %p95 = scmp.eq.s32.totalorder %s20, 1
      %p96 = por %p94, %p95
      %p98 = scmp.ne.s32.totalorder %s81, %s97
      %p99 = scmp.eq.s32.totalorder %s20, 0
      %p100 = por %p98, %p99
      %s101 = sadd.s32 %s21, %s22
      %s102 = sadd.s32 %s40, %s36
      %s103 = ssub.s32 %s101, %s102
      %p104 = scmp.eq.s32.totalorder %s103, 0
      %s106 = sadd.s32 %s105, 1
      %s107 = scalar_select %p104, %s105, %s106
      %p110 = pneg %p104
      %p111 = scmp.eq.s32.totalorder %s14, 1
      %p112 = por %p110, %p111
      %p113 = scmp.ne.s32.totalorder %s105, %s108
      %p114 = scmp.eq.s32.totalorder %s14, 0
      %p115 = por %p113, %p114
      %p116 = scmp.ne.s32.totalorder %s105, %s108
      %p117 = scmp.eq.s32.totalorder %s19, 1
      %p118 = por %p116, %p117
      %p119 = scmp.ne.s32.totalorder %s108, %s109
      %p120 = scmp.eq.s32.totalorder %s19, 0
      %p121 = por %p119, %p120
      %p122 = scmp.ne.s32.totalorder %s108, %s109
      %p123 = scmp.eq.s32.totalorder %s20, 1
      %p124 = por %p122, %p123
      %p126 = scmp.ne.s32.totalorder %s109, %s125
      %p127 = scmp.eq.s32.totalorder %s20, 0
      %p128 = por %p126, %p127
      %s129 = sadd.s32 %s21, %s22
      %s130 = sadd.s32 %s40, %s36
      %s131 = ssub.s32 %s129, %s130
      %p132 = scmp.eq.s32.totalorder %s131, 0
      %s134 = sadd.s32 %s133, 1
      %s135 = scalar_select %p132, %s133, %s134
      %p138 = pneg %p132
      %p139 = scmp.eq.s32.totalorder %s14, 1
      %p140 = por %p138, %p139
      %p141 = scmp.ne.s32.totalorder %s133, %s136
      %p142 = scmp.eq.s32.totalorder %s14, 0
      %p143 = por %p141, %p142
      %p144 = scmp.ne.s32.totalorder %s133, %s136
      %p145 = scmp.eq.s32.totalorder %s19, 1
      %p146 = por %p144, %p145
      %p147 = scmp.ne.s32.totalorder %s136, %s137
      %p148 = scmp.eq.s32.totalorder %s19, 0
      %p149 = por %p147, %p148
      %p150 = scmp.ne.s32.totalorder %s136, %s137
      %p151 = scmp.eq.s32.totalorder %s20, 1
      %p152 = por %p150, %p151
      %p154 = scmp.ne.s32.totalorder %s137, %s153
      %p155 = scmp.eq.s32.totalorder %s20, 0
      %p156 = por %p154, %p155
      %s157 = sadd.s32 %s21, %s22
      %s158 = sadd.s32 %s40, %s36
      %s159 = ssub.s32 %s157, %s158
      %p160 = scmp.eq.s32.totalorder %s159, 0
      %s162 = sadd.s32 %s161, 1
      %s163 = scalar_select %p160, %s161, %s162
      %p166 = pneg %p160
      %p167 = scmp.eq.s32.totalorder %s14, 1
      %p168 = por %p166, %p167
      %p169 = scmp.ne.s32.totalorder %s161, %s164
      %p170 = scmp.eq.s32.totalorder %s14, 0
      %p171 = por %p169, %p170
      %p172 = scmp.ne.s32.totalorder %s161, %s164
      %p173 = scmp.eq.s32.totalorder %s19, 1
      %p174 = por %p172, %p173
      %p175 = scmp.ne.s32.totalorder %s164, %s165
      %p176 = scmp.eq.s32.totalorder %s19, 0
      %p177 = por %p175, %p176
      %p178 = scmp.ne.s32.totalorder %s164, %s165
      %p179 = scmp.eq.s32.totalorder %s20, 1
      %p180 = por %p178, %p179
      %p182 = scmp.ne.s32.totalorder %s165, %s181
      %p183 = scmp.eq.s32.totalorder %s20, 0
      %p184 = por %p182, %p183
      %p185 = scmp.le.s32.totalorder 1, %s14
      %p186 = scmp.lt.s32.totalorder %s14, 3
      %p187 = pnand %p185, %p186
      %p188 = pneg %p187
      // Predicated region
      $region9: #{tpu_custom_call.1} parent=5 // pred_check
        _
      $region10: #{tpu_custom_call.1} parent=5 // pred_check_branch
        %190 = sbr.rel (%p187) target = $region12
      $region11: #{tpu_custom_call.1} parent=5 // pred_region
        %s191 = ssub.s32 %s14, 1
      $region12: #{tpu_custom_call.1} parent=5 // pred_fallthru
        _
      %p192 = scmp.lt.s32.totalorder %s14, 2
      // Predicated region
      $region13: #{tpu_custom_call.1} parent=5 // pred_check
        %p193 = pneg %p192
      $region14: #{tpu_custom_call.1} parent=5 // pred_check_branch
        %195 = sbr.rel (%p193) target = $region16
      $region15: #{tpu_custom_call.1} parent=5 // pred_region
        // Predicated region
        $region17: #{tpu_custom_call.1} parent=15 // pred_check
          %p196 = pneg %p57
        $region18: #{tpu_custom_call.1} parent=15 // pred_check_branch
          %198 = sbr.rel (%p196) target = $region20
        $region19: #{tpu_custom_call.1} parent=15 // pred_region
          %s199 = sand.u32 %s47, 1
          %s200 = scalar_lea.sflag [#allocation3], %s199
          %s201 = sand.u32 %s47, 1
          %s202 = smul.addr %s201, 16
          %s203 = scalar_lea.vmem [#allocation2], %s202
          %s204 = sadd.s32 %s22, %s23
          %s205 = smul.u32 4, %s204
          %s207 = ssub.s32 256, 256
          %208 = vsyncadd %s200, %s207
          %s209 = smul.addr %s21, 4
          %s210 = sadd.s32 %s205, %s209
          %s211 = smul.addr %s210, 64
          %s212 = scalar_lea.hbm %s0, %s211
          %s214 = sshll.u32 %s203, 4
          %s215 = int_to_ptr.vmem [resolvable:$true] %s214
          %217 = dma.hbm_to_vmem [thread:$0]  %s212, 256, %s215, %s200
        $region20: #{tpu_custom_call.1} parent=15 // pred_fallthru
          _
        // Predicated region
        $region21: #{tpu_custom_call.1} parent=15 // pred_check
          %p218 = pneg %p87
        $region22: #{tpu_custom_call.1} parent=15 // pred_check_branch
          %220 = sbr.rel (%p218) target = $region24
        $region23: #{tpu_custom_call.1} parent=15 // pred_region
          %s221 = sadd.s32 %s22, %s23
          %s222 = smul.u32 4, %s221
          %p223 = scmp.lt.s32.totalorder %s21, 1
          %s224 = scalar_select %p223, %s21, 1
          %p225 = scmp.lt.s32.totalorder %s222, 3
          %s226 = scalar_select %p225, %s222, 3
          %s227 = smul.addr %s224, 4
          %s228 = sadd.s32 %s226, %s227
          %s229 = scalar_lea.vmem %s1, %s228
          %s230 = sadd.s32 %s22, %s23
          %s231 = smul.u32 4, %s230
        $region24: #{tpu_custom_call.1} parent=15 // pred_fallthru
          _
      $region16: #{tpu_custom_call.1} parent=5 // pred_fallthru
        _
      %p232 = scmp.le.s32.totalorder 1, %s14
      %p233 = scmp.lt.s32.totalorder %s14, 3
      %p234 = pnand %p232, %p233
      %p235 = pneg %p234
      // Predicated region
      $region25: #{tpu_custom_call.1} parent=5 // pred_check
        _
      $region26: #{tpu_custom_call.1} parent=5 // pred_check_branch
        %237 = sbr.rel (%p234) target = $region28
      $region27: #{tpu_custom_call.1} parent=5 // pred_region
        %s238 = ssub.s32 %s14, 1
        %s239 = sand.u32 %s50, 1
        %s240 = scalar_lea.sflag [#allocation3], %s239
        %s241 = sand.u32 %s50, 1
        %s242 = smul.addr %s241, 16
        %s243 = scalar_lea.vmem [#allocation2], %s242
        // Predicated region
        $region29: #{tpu_custom_call.1} parent=27 // pred_check
          %p244 = pneg %p63
        $region30: #{tpu_custom_call.1} parent=27 // pred_check_branch
          %246 = sbr.rel (%p244) target = $region32
        $region31: #{tpu_custom_call.1} parent=27 // pred_region
          %247 = dma.done %s240, 256
        $region32: #{tpu_custom_call.1} parent=27 // pred_fallthru
          _
        %s248 = sand.u32 %s50, 1
        %s249 = scalar_lea.sflag [#allocation3], %s248
        %s250 = sand.u32 %s50, 1
        %s251 = smul.addr %s250, 16
        %s252 = scalar_lea.vmem [#allocation2], %s251
        %p253 = pneg %p63
        %p254 = pneg %p60
        %s255 = sadd.s32 %s25, %s26
        %s256 = smul.u32 4, %s255
        %p257 = scmp.lt.s32.totalorder %s24, 1
        %s258 = scalar_select %p257, %s24, 1
        %p259 = scmp.lt.s32.totalorder %s256, 3
        %s260 = scalar_select %p259, %s256, 3
        %s261 = smul.addr %s258, 4
        %s262 = sadd.s32 %s260, %s261
        %s263 = scalar_lea.vmem %s1, %s262
        %p264 = pneg %p93
        %p265 = pneg %p90
        %p266 = pneg %p121
        %p267 = pneg %p118
        %s268 = sadd.s32 %s24, %s25
        %p269 = scmp.lt.s32.totalorder %s268, 1
        %s270 = scalar_select %p269, %s268, 1
        %s271 = smul.addr %s270, 4
        %s272 = scalar_lea.vmem %s2, %s271
        %p273 = pneg %p149
        %p274 = pneg %p146
        %s275 = sadd.s32 %s24, %s25
        %p276 = scmp.lt.s32.totalorder %s275, 1
        %s277 = scalar_select %p276, %s275, 1
        %s278 = smul.addr %s277, 4
        %s279 = scalar_lea.vmem %s3, %s278
        %p280 = pneg %p177
        %p281 = pneg %p174
        %s282 = sadd.s32 %s24, %s25
        %p283 = scmp.lt.s32.totalorder %s282, 1
        %s284 = scalar_select %p283, %s282, 1
        %s285 = smul.addr %s284, 4
        %s286 = scalar_lea.vmem %s4, %s285
        %s287 = sadd.s32 %s25, %s26
        %s288 = smul.u32 4, %s287
        %s289 = sadd.s32 %s25, %s26
        %s290 = smul.u32 4, %s289
        %p291 = scmp.lt.s32.totalorder %s24, 1
        %s292 = scalar_select %p291, %s24, 1
        %p293 = scmp.lt.s32.totalorder %s290, 3
        %s294 = scalar_select %p293, %s290, 3
        %s295 = smul.addr %s292, 4
        %s296 = sadd.s32 %s294, %s295
        %s297 = scalar_lea.vmem %s1, %s296
        %s298 = sadd.s32 %s25, %s26
        %s299 = smul.u32 4, %s298
        %s300 = sadd.s32 %s24, %s25
        %p301 = scmp.lt.s32.totalorder %s300, 1
        %s302 = scalar_select %p301, %s300, 1
        %s303 = smul.addr %s302, 4
        %s304 = scalar_lea.vmem %s2, %s303
        %s305 = sadd.s32 %s24, %s25
        %s306 = sadd.s32 %s24, %s25
        %p307 = scmp.lt.s32.totalorder %s306, 1
        %s308 = scalar_select %p307, %s306, 1
        %s309 = smul.addr %s308, 4
        %s310 = scalar_lea.vmem %s3, %s309
        %s311 = sadd.s32 %s24, %s25
        %s312 = sadd.s32 %s24, %s25
        %p313 = scmp.lt.s32.totalorder %s312, 1
        %s314 = scalar_select %p313, %s312, 1
        %s315 = smul.addr %s314, 4
        %s316 = scalar_lea.vmem %s4, %s315
        %s317 = sadd.s32 %s24, %s25
        %p318 = scmp.eq.s32.totalorder %s26, 0
        // Predicated region
        $region33: #{tpu_custom_call.1} parent=27 // pred_check
          %p319 = pneg %p318
        $region34: #{tpu_custom_call.1} parent=27 // pred_check_branch
          %321 = sbr.rel (%p319) target = $region36
        $region35: #{tpu_custom_call.1} parent=27 // pred_region
          %vm322 = vcmask 3072
          %323 = vst.msk [vmem:[%s304] sm:$0xf] %vm322, 0.0
          %324 = vst.msk [vmem:[%s310] sm:$0xf] %vm322, 0.0
          %325 = vst.msk [vmem:[%s316] sm:$0xf] %vm322, 0.0
        $region36: #{tpu_custom_call.1} parent=27 // pred_fallthru
          _
        %v326 = vld [vmem:[%s243] sm:$0xff]
        %v327 = vld [vmem:[%s243 + $0x8] sm:$0xff]
        %v328 = vld [vmem:[%s297] sm:$0xf]
        %v329 = vunpack.c.0.s8 %v328
        %v330 = vunpack.c.1.s8 %v328
        %v333 = vcombine.high %v326, %v326
        %v334 = vcombine.high %v327, %v327
        %vm337 = vcmask 1043456
        %v338 = vsel %vm337, %v326, -inf
        %v339 = vrot.slane %v338, 4
        %v340 = vmax.f32 %v338, %v339
        %v341 = vrot.slane %v340, 2
        %v342 = vmax.f32 %v340, %v341
        %v343 = vrot.slane %v342, 1
        %v344 = vmax.f32 %v342, %v343
        %v345 = vsel %vm337, %v333, -inf
        %v346 = vrot.slane %v345, 4
        %v347 = vmax.f32 %v345, %v346
        %v348 = vrot.slane %v347, 2
        %v349 = vmax.f32 %v347, %v348
        %v350 = vrot.slane %v349, 1
        %v351 = vmax.f32 %v349, %v350
        %v352 = vsel %vm337, %v327, -inf
        %v353 = vrot.slane %v352, 4
        %v354 = vmax.f32 %v352, %v353
        %v355 = vrot.slane %v354, 2
        %v356 = vmax.f32 %v354, %v355
        %v357 = vrot.slane %v356, 1
        %v358 = vmax.f32 %v356, %v357
        %v359 = vsel %vm337, %v334, -inf
        %v360 = vrot.slane %v359, 4
        %v361 = vmax.f32 %v359, %v360
        %v362 = vrot.slane %v361, 2
        %v363 = vmax.f32 %v361, %v362
        %v364 = vrot.slane %v363, 1
        %v365 = vmax.f32 %v363, %v364
        %v370 = vcombine.low %v344, %v351
        %v371 = vcombine.low %v358, %v365
        %v374 = vsub.f32 %v326, %v370
        %v375 = vsub.f32 %v327, %v371
        %v376 = vmul.f32 %v374, 1.442695
        %v377 = vpow.pop %v376
        %v378 = vmul.f32 %v375, 1.442695
        %v379 = vpow.pop %v378
        %v382 = vcombine.high %v377, %v377
        %v383 = vcombine.high %v379, %v379
        %v386 = vsel %vm337, %v377, 0.0
        %v387 = vrot.slane %v386, 4
        %v388 = vadd.f32 %v386, %v387
        %v389 = vrot.slane %v388, 2
        %v390 = vadd.f32 %v388, %v389
        %v391 = vrot.slane %v390, 1
        %v392 = vadd.f32 %v390, %v391
        %v393 = vsel %vm337, %v382, 0.0
        %v394 = vrot.slane %v393, 4
        %v395 = vadd.f32 %v393, %v394
        %v396 = vrot.slane %v395, 2
        %v397 = vadd.f32 %v395, %v396
        %v398 = vrot.slane %v397, 1
        %v399 = vadd.f32 %v397, %v398
        %v400 = vsel %vm337, %v379, 0.0
        %v401 = vrot.slane %v400, 4
        %v402 = vadd.f32 %v400, %v401
        %v403 = vrot.slane %v402, 2
        %v404 = vadd.f32 %v402, %v403
        %v405 = vrot.slane %v404, 1
        %v406 = vadd.f32 %v404, %v405
        %v407 = vsel %vm337, %v383, 0.0
        %v408 = vrot.slane %v407, 4
        %v409 = vadd.f32 %v407, %v408
        %v410 = vrot.slane %v409, 2
        %v411 = vadd.f32 %v409, %v410
        %v412 = vrot.slane %v411, 1
        %v413 = vadd.f32 %v411, %v412
        %v414 = vrcp.pop %v392
        %v415 = vrcp.pop %v399
        %v416 = vrcp.pop %v406
        %v417 = vrcp.pop %v413
        %v422 = vcombine.low %v414, %v415
        %v423 = vcombine.low %v416, %v417
        %v426 = vmul.f32 %v377, %v422
        %v427 = vmul.f32 %v379, %v423
        %v428 = vlaneseq
        %v429 = vshrl.u32 %v428, 7
        %v430 = vlaneseq
        %v431 = vshrl.u32 %v430, 7
        %v432 = vsub.s32 0, %v431
        %v433 = vrot.slane %v329, %v432
        %v434 = vlaneseq
        %v435 = vshrl.u32 %v434, 7
        %v436 = vsub.s32 4, %v435
        %v437 = vrot.slane %v329, %v436
        %v438 = vlaneseq
        %v439 = vshrl.u32 %v438, 7
        %v440 = vsub.s32 0, %v439
        %v441 = vrot.slane %v330, %v440
        %v442 = vlaneseq
        %v443 = vshrl.u32 %v442, 7
        %v444 = vsub.s32 4, %v443
        %v445 = vrot.slane %v330, %v444
        %v446 = vlaneseq
        %v447 = vshrl.u32 %v446, 7
        %v448 = vsub.s32 0, %v447
        %v449 = vrot.slane %v433, %v448
        %v450 = vlaneseq
        %v451 = vshrl.u32 %v450, 7
        %v452 = vsub.s32 0, %v451
        %v453 = vrot.slane %v437, %v452
        %v454 = vlaneseq
        %v455 = vshrl.u32 %v454, 7
        %v456 = vsub.s32 0, %v455
        %v457 = vrot.slane %v441, %v456
        %v458 = vlaneseq
        %v459 = vshrl.u32 %v458, 7
        %v460 = vsub.s32 0, %v459
        %v461 = vrot.slane %v445, %v460
        %vm462 = vcmp.eq.s32.totalorder %v429, %v449
        %vm463 = vcmp.eq.s32.totalorder %v429, %v453
        %vm464 = vcmp.eq.s32.totalorder %v429, %v457
        %vm465 = vcmp.eq.s32.totalorder %v429, %v461
        %v466 = vsel %vm462, 1, 0
        %v467 = vsel %vm463, 1, 0
        %v468 = vsel %vm464, 1, 0
        %v469 = vsel %vm465, 1, 0
        %v470 = vcvt.s32.f32 %v466
        %v471 = vcvt.s32.f32 %v467
        %v472 = vcvt.s32.f32 %v468
        %v473 = vcvt.s32.f32 %v469
        %v474 = vld [vmem:[%s304] sm:$0xf]
        %v479 = vcombine.low %v470, %v471
        %v480 = vcombine.low %v472, %v473
        %v483 = vmul.f32 %v426, %v479
        %v484 = vmul.f32 %v427, %v480
        %v487 = vcombine.high %v483, %v483
        %v488 = vcombine.high %v484, %v484
        %v491 = vsel %vm337, %v483, 0.0
        %v492 = vsel %vm337, %v487, 0.0
        %v493 = vadd.f32 %v491, %v492
        %v494 = vsel %vm337, %v484, 0.0
        %v495 = vadd.f32 %v493, %v494
        %v496 = vsel %vm337, %v488, 0.0
        %v497 = vadd.f32 %v495, %v496
        %498 = vadd.xlane.f32.xlu0 %v497
        %v499 = vpop.xlane.xlu0 %498
        %v500 = vadd.f32 %v474, %v499
        %vm501 = vcmask 3072
        %502 = vst.msk [vmem:[%s304] sm:$0xf] %vm501, %v500
        %v503 = vld [vmem:[%s310] sm:$0xf]
        %v504 = vmul.f32 %v426, %v426
        %v505 = vmul.f32 %v427, %v427
        %v508 = vcombine.high %v504, %v504
        %v509 = vcombine.high %v505, %v505
        %v512 = vsel %vm337, %v504, 0.0
        %v513 = vsel %vm337, %v508, 0.0
        %v514 = vadd.f32 %v512, %v513
        %v515 = vsel %vm337, %v505, 0.0
        %v516 = vadd.f32 %v514, %v515
        %v517 = vsel %vm337, %v509, 0.0
        %v518 = vadd.f32 %v516, %v517
        %519 = vadd.xlane.f32.xlu0 %v518
        %v520 = vpop.xlane.xlu0 %519
        %v521 = vadd.f32 %v503, %v520
        %522 = vst.msk [vmem:[%s310] sm:$0xf] %vm501, %v521
        %v523 = vld [vmem:[%s316] sm:$0xf]
        %v524 = vsel %vm337, %v470, 0.0
        %v525 = vsel %vm337, %v471, 0.0
        %v526 = vadd.f32 %v524, %v525
        %v527 = vsel %vm337, %v472, 0.0
        %v528 = vadd.f32 %v526, %v527
        %v529 = vsel %vm337, %v473, 0.0
        %v530 = vadd.f32 %v528, %v529
        %531 = vadd.xlane.f32.xlu0 %v530
        %v532 = vpop.xlane.xlu0 %531
        %v533 = vadd.f32 %v523, %v532
        %534 = vst.msk [vmem:[%s316] sm:$0xf] %vm501, %v533
        %s535 = sadd.s32 %s24, %s25
        %p536 = scmp.lt.s32.totalorder %s535, 1
        %s537 = scalar_select %p536, %s535, 1
        %s538 = smul.addr %s537, 4
        %s539 = scalar_lea.vmem %s2, %s538
        %s540 = sadd.s32 %s24, %s25
        %p541 = scmp.lt.s32.totalorder %s540, 1
        %s542 = scalar_select %p541, %s540, 1
        %s543 = smul.addr %s542, 4
        %s544 = scalar_lea.vmem %s3, %s543
        %s545 = sadd.s32 %s24, %s25
        %p546 = scmp.lt.s32.totalorder %s545, 1
        %s547 = scalar_select %p546, %s545, 1
        %s548 = smul.addr %s547, 4
        %s549 = scalar_lea.vmem %s4, %s548
        // Predicated region
        $region37: #{tpu_custom_call.1} parent=27 // pred_check
          %p550 = pneg %p118
        $region38: #{tpu_custom_call.1} parent=27 // pred_check_branch
          %552 = sbr.rel (%p550) target = $region40
        $region39: #{tpu_custom_call.1} parent=27 // pred_region
          %s553 = sadd.s32 %s24, %s25
        $region40: #{tpu_custom_call.1} parent=27 // pred_fallthru
          _
        // Predicated region
        $region41: #{tpu_custom_call.1} parent=27 // pred_check
          %p554 = pneg %p146
        $region42: #{tpu_custom_call.1} parent=27 // pred_check_branch
          %556 = sbr.rel (%p554) target = $region44
        $region43: #{tpu_custom_call.1} parent=27 // pred_region
          %s557 = sadd.s32 %s24, %s25
        $region44: #{tpu_custom_call.1} parent=27 // pred_fallthru
          _
        // Predicated region
        $region45: #{tpu_custom_call.1} parent=27 // pred_check
          %p558 = pneg %p174
        $region46: #{tpu_custom_call.1} parent=27 // pred_check_branch
          %560 = sbr.rel (%p558) target = $region48
        $region47: #{tpu_custom_call.1} parent=27 // pred_region
          %s561 = sadd.s32 %s24, %s25
        $region48: #{tpu_custom_call.1} parent=27 // pred_fallthru
          _
      $region28: #{tpu_custom_call.1} parent=5 // pred_fallthru
        _
      %p562 = scmp.le.s32.totalorder 2, %s14
      // Predicated region
      $region49: #{tpu_custom_call.1} parent=5 // pred_check
        %p563 = pneg %p562
      $region50: #{tpu_custom_call.1} parent=5 // pred_check_branch
        %565 = sbr.rel (%p563) target = $region52
      $region51: #{tpu_custom_call.1} parent=5 // pred_region
        %s566 = ssub.s32 %s14, 2
        // Predicated region
        $region53: #{tpu_custom_call.1} parent=51 // pred_check
          %p567 = pneg %p124
        $region54: #{tpu_custom_call.1} parent=51 // pred_check_branch
          %569 = sbr.rel (%p567) target = $region56
        $region55: #{tpu_custom_call.1} parent=51 // pred_region
          %s570 = sadd.s32 %s27, %s28
          %p571 = scmp.lt.s32.totalorder %s570, 1
          %s572 = scalar_select %p571, %s570, 1
          %s573 = smul.addr %s572, 4
          %s574 = scalar_lea.vmem %s2, %s573
        $region56: #{tpu_custom_call.1} parent=51 // pred_fallthru
          _
        // Predicated region
        $region57: #{tpu_custom_call.1} parent=51 // pred_check
          %p575 = pneg %p152
        $region58: #{tpu_custom_call.1} parent=51 // pred_check_branch
          %577 = sbr.rel (%p575) target = $region60
        $region59: #{tpu_custom_call.1} parent=51 // pred_region
          %s578 = sadd.s32 %s27, %s28
          %p579 = scmp.lt.s32.totalorder %s578, 1
          %s580 = scalar_select %p579, %s578, 1
          %s581 = smul.addr %s580, 4
          %s582 = scalar_lea.vmem %s3, %s581
        $region60: #{tpu_custom_call.1} parent=51 // pred_fallthru
          _
        // Predicated region
        $region61: #{tpu_custom_call.1} parent=51 // pred_check
          %p583 = pneg %p180
        $region62: #{tpu_custom_call.1} parent=51 // pred_check_branch
          %585 = sbr.rel (%p583) target = $region64
        $region63: #{tpu_custom_call.1} parent=51 // pred_region
          %s586 = sadd.s32 %s27, %s28
          %p587 = scmp.lt.s32.totalorder %s586, 1
          %s588 = scalar_select %p587, %s586, 1
          %s589 = smul.addr %s588, 4
          %s590 = scalar_lea.vmem %s4, %s589
        $region64: #{tpu_custom_call.1} parent=51 // pred_fallthru
          _
      $region52: #{tpu_custom_call.1} parent=5 // pred_fallthru
        _
    $region6: #{tpu_custom_call.1} parent=1 // loop_footer
      %s18 = sadd.s32 1, %s14
    $region7: #{tpu_custom_call.1} parent=1 // loop_footer_branch
      %13 = sbr.rel target = $region3
    $region8: #{tpu_custom_call.1} parent=1 // loop_exit
      _
    %591 = vsyncpa [#allocation3], 1
    %s592 = scalar_lea.sflag [#allocation3], 1
    %593 = vsyncpa %s592, 1

</llo_original>
